<compile_context>
chip_gen: v7x
topology: tpu7x:2x2x1
jax: 0.10.0
libtpu: 0.0.40
codegen_flags: <defaults>
</compile_context>

<pallas_src>
import jax
import jax.numpy as jnp
from jax.experimental import pallas as pl
from jax.experimental.pallas import tpu as pltpu

_LANE = 128
_SUBLANE = 8
# Conservative budget for the double-buffered tile working set: safe on
# v5e/v6e (128 MiB physical VMEM) and v7x (64 MiB physical, 32 MiB scoped
# default).
_TILE_BUDGET_BYTES = 16 * 1024 * 1024
_VMEM_LIMIT_BYTES = 32 * 1024 * 1024


def _round_up(x, m):
    return ((x + m - 1) // m) * m


def _conv1x1_relu_kernel(x_ref, w_ref, o_ref):
    """out[g] = relu(W @ x[g]) for each batch element g in this block.

    x_ref: (G, C_in, TILE_P)  -- pixels on lanes (lane-dense)
    w_ref: (C_out, C_in)      -- tiny resident weight
    o_ref: (G, C_out, TILE_P)
    """
    w = w_ref[...]
    # G is a small static constant (<= 16), so the unroll is cheap and keeps
    # everything as plain 2-D MXU matmuls.
    for g in range(x_ref.shape[0]):
        acc = jnp.dot(w, x_ref[g], preferred_element_type=jnp.float32)
        o_ref[g] = jnp.maximum(acc, 0.0).astype(o_ref.dtype)


def _plan_tiles(N, C_in, C_out, P):
    """Pick (G, tile_p, padded_P) for the grid.

    Returns batch-group size G, pixel tile tile_p, padded pixel extent, and a
    flag marking the single-step path.
    """
    dtype_bytes = 4
    # Per-pixel, per-batch bytes of (input + output) rows, including the
    # sublane padding Mosaic will apply to the second-minor dims.
    row_bytes = (_round_up(C_in, _SUBLANE) + _round_up(C_out, _SUBLANE)) * dtype_bytes

    # --- Single-step path: the whole problem fits comfortably in VMEM. ---
    p_full = P if P % _LANE == 0 else _round_up(P, _LANE)
    single_step_bytes = N * row_bytes * p_full
    if single_step_bytes <= _TILE_BUDGET_BYTES and N <= 16:
        # One grid step, full-array blocks (full extent sidesteps the (8,128)
        # divisibility rule, so no pixel padding is needed here).
        return N, P, P, True

    # --- Tiled path. ---
    padded_P = _round_up(P, _LANE)  # keep every tile / store lane-dense

    # Sublane packing: group ceil(8 / C_in) batch elements per step so tiny
    # channel counts fill the 8 sublanes and grid steps / DMA count halve.
    G = min(N, max(1, _SUBLANE // max(C_in, 1)))

    # VMEM-budget-aware tile_p: double-buffered in+out tiles must fit budget.
    tile_p = _TILE_BUDGET_BYTES // (2 * G * row_bytes)
    tile_p = max(_LANE, (tile_p // _LANE) * _LANE)
    tile_p = min(tile_p, padded_P)

    # Keep at least a few grid steps alive so the BlockSpec pipeline (and
    # v7x's 2 TensorCores on the parallel axes) has something to overlap.
    while tile_p > 512 and pl.cdiv(padded_P, tile_p) * pl.cdiv(N, G) < 4:
        tile_p = max(512, (tile_p // 2 // _LANE) * _LANE)

    return G, tile_p, padded_P, False


def trans_student_forward(x_nchw, weight):
    """Equivalent of Trans_Student.forward: relu(conv1x1(x)), no bias.

    Args:
      x_nchw: (N, C_in, H, W) float32
      weight: (C_out, C_in) or (C_out, C_in, 1, 1) float32 (nn.Conv2d weight)

    Returns:
      (N, C_out, H, W) float32
    """
    if weight.ndim == 4:  # (C_out, C_in, 1, 1) from nn.Conv2d
        weight = weight.reshape(weight.shape[0], weight.shape[1])

    N, C_in, H, W = x_nchw.shape
    C_out = weight.shape[0]
    P = H * W

    # NCHW -> (N, C_in, H*W): pure reshape, no data movement.
    x_rows = x_nchw.reshape(N, C_in, P)

    G, tile_p, padded_P, _single_step = _plan_tiles(N, C_in, C_out, P)
    if padded_P != P:
        # Pad the pixel (lane) axis so every tile / store stays lane-dense.
        x_rows = jnp.pad(x_rows, ((0, 0), (0, 0), (0, padded_P - P)))

    grid = (pl.cdiv(N, G), pl.cdiv(padded_P, tile_p))

    cost = pl.CostEstimate(
        flops=2 * N * P * C_in * C_out,
        transcendentals=0,
        bytes_accessed=4 * (N * C_in * P + C_in * C_out + N * C_out * P),
    )

    out = pl.pallas_call(
        _conv1x1_relu_kernel,
        out_shape=jax.ShapeDtypeStruct((N, C_out, padded_P), x_nchw.dtype),
        grid=grid,
        in_specs=[
            # G batch elements x all channels x one lane-dense pixel tile.
            pl.BlockSpec((G, C_in, tile_p), lambda n, p: (n, 0, p)),
            # Tiny weight block, resident across the whole grid.
            pl.BlockSpec((C_out, C_in), lambda n, p: (0, 0)),
        ],
        out_specs=pl.BlockSpec((G, C_out, tile_p), lambda n, p: (n, 0, p)),
        compiler_params=pltpu.CompilerParams(
            dimension_semantics=("parallel", "parallel"),
            vmem_limit_bytes=_VMEM_LIMIT_BYTES,
        ),
        cost_estimate=cost,
    )(x_rows, weight)

    if padded_P != P:
        out = out[:, :, :P]

    # (N, C_out, H*W) -> NCHW: pure reshape, no data movement.
    return out.reshape(N, C_out, H, W)


if __name__ == "__main__":
    # Small shapes consistent with the module: batch=2, in_ch=4, out_ch=8, 16x16.
    N, C_IN, C_OUT, HW = 2, 4, 8, 16

    key = jax.random.PRNGKey(0)
    kx, kw = jax.random.split(key)

    x = jax.random.normal(kx, (N, C_IN, HW, HW), dtype=jnp.float32)
    # Deterministic Kaiming-uniform-like init for a (C_out, C_in, 1, 1) conv weight.
    bound = (1.0 / C_IN) ** 0.5
    weight = jax.random.uniform(
        kw, (C_OUT, C_IN), minval=-bound, maxval=bound, dtype=jnp.float32
    )

    y = trans_student_forward(x, weight)
    jax.block_until_ready(y)

    # Cross-check against plain-JAX reference (1x1 conv == channel matmul + ReLU).
    ref = jnp.maximum(jnp.einsum("nchw,oc->nohw", x, weight), 0.0)
    assert y.shape == (N, C_OUT, HW, HW)
    assert jnp.allclose(y, ref, atol=1e-5, rtol=1e-5)

    print("KERNEL_OK")
</pallas_src>

<mosaic_0001>
module attributes {stable_mosaic.version = 11 : i64} {
  func.func @_conv1x1_relu_kernel(%arg0: i32, %arg1: i32, %arg2: memref<2x4x256xf32, #tpu.memory_space<vmem>>, %arg3: memref<8x4xf32, #tpu.memory_space<vmem>>, %arg4: memref<2x8x256xf32, #tpu.memory_space<vmem>>) attributes {dimension_semantics = [#tpu.dimension_semantics<parallel>, #tpu.dimension_semantics<parallel>], iteration_bounds = array<i64: 1, 1>, scalar_prefetch = 0 : i64, scratch_operands = 0 : i64, tpu.core_type = #tpu.core_type<tc>, window_params = [{transform_indices = @transform_0, window_bounds = array<i64: 2, 4, 256>}, {pipeline_mode = #tpu.pipeline_mode<synchronous>, transform_indices = @transform_1, window_bounds = array<i64: 8, 4>}, {transform_indices = @transform_2, window_bounds = array<i64: 2, 8, 256>}]} {
    %c0 = arith.constant 0 : index
    %c0_0 = arith.constant 0 : index
    %0 = vector.load %arg3[%c0, %c0_0] : memref<8x4xf32, #tpu.memory_space<vmem>>, vector<8x4xf32>
    %c0_1 = arith.constant 0 : index
    %c0_2 = arith.constant 0 : index
    %c0_3 = arith.constant 0 : index
    %1 = vector.load %arg2[%c0_1, %c0_2, %c0_3] : memref<2x4x256xf32, #tpu.memory_space<vmem>>, vector<1x4x256xf32>
    %2 = vector.shape_cast %1 : vector<1x4x256xf32> to vector<4x256xf32>
    %cst = arith.constant dense<0.000000e+00> : vector<8x256xf32>
    %3 = tpu.matmul %0, %2, %cst {dimension_numbers = #tpu.dot_dimension_numbers<[1], [0], [0], [1], [0, 0, 1, 1], [], []>} : vector<8x4xf32>, vector<4x256xf32>, vector<8x256xf32> -> vector<8x256xf32>
    %cst_4 = arith.constant 0.000000e+00 : f32
    %4 = vector.broadcast %cst_4 : f32 to vector<8x256xf32>
    %5 = arith.maximumf %3, %4 : vector<8x256xf32>
    %c0_5 = arith.constant 0 : index
    %c0_6 = arith.constant 0 : index
    %c0_7 = arith.constant 0 : index
    %6 = vector.load %arg4[%c0_5, %c0_6, %c0_7] : memref<2x8x256xf32, #tpu.memory_space<vmem>>, vector<1x8x256xf32>
    %7 = vector.shape_cast %6 : vector<1x8x256xf32> to vector<8x256xf32>
    %8 = vector.shape_cast %5 : vector<8x256xf32> to vector<1x8x256xf32>
    tpu.vector_store %arg4[%c0_5, %c0_6, %c0_7], %8 {strides = array<i32>} : memref<2x8x256xf32, #tpu.memory_space<vmem>>, vector<1x8x256xf32>,
    %c1 = arith.constant 1 : index
    %c0_8 = arith.constant 0 : index
    %c0_9 = arith.constant 0 : index
    %9 = vector.load %arg2[%c1, %c0_8, %c0_9] : memref<2x4x256xf32, #tpu.memory_space<vmem>>, vector<1x4x256xf32>
    %10 = vector.shape_cast %9 : vector<1x4x256xf32> to vector<4x256xf32>
    %cst_10 = arith.constant dense<0.000000e+00> : vector<8x256xf32>
    %11 = tpu.matmul %0, %10, %cst_10 {dimension_numbers = #tpu.dot_dimension_numbers<[1], [0], [0], [1], [0, 0, 1, 1], [], []>} : vector<8x4xf32>, vector<4x256xf32>, vector<8x256xf32> -> vector<8x256xf32>
    %cst_11 = arith.constant 0.000000e+00 : f32
    %12 = vector.broadcast %cst_11 : f32 to vector<8x256xf32>
    %13 = arith.maximumf %11, %12 : vector<8x256xf32>
    %c1_12 = arith.constant 1 : index
    %c0_13 = arith.constant 0 : index
    %c0_14 = arith.constant 0 : index
    %14 = vector.load %arg4[%c1_12, %c0_13, %c0_14] : memref<2x8x256xf32, #tpu.memory_space<vmem>>, vector<1x8x256xf32>
    %15 = vector.shape_cast %14 : vector<1x8x256xf32> to vector<8x256xf32>
    %16 = vector.shape_cast %13 : vector<8x256xf32> to vector<1x8x256xf32>
    tpu.vector_store %arg4[%c1_12, %c0_13, %c0_14], %16 {strides = array<i32>} : memref<2x8x256xf32, #tpu.memory_space<vmem>>, vector<1x8x256xf32>,
    return
  }
  func.func @transform_0(%arg0: i32, %arg1: i32) -> (i32, i32, i32) {
    %c0_i32 = arith.constant 0 : i32
    %c0_i32_0 = arith.constant 0 : i32
    return %arg0, %c0_i32, %arg1 : i32, i32, i32
  }
  func.func @transform_1(%arg0: i32, %arg1: i32) -> (i32, i32) {
    %c0_i32 = arith.constant 0 : i32
    %c0_i32_0 = arith.constant 0 : i32
    %c0_i32_1 = arith.constant 0 : i32
    return %c0_i32, %c0_i32_0 : i32, i32
  }
  func.func @transform_2(%arg0: i32, %arg1: i32) -> (i32, i32, i32) {
    %c0_i32 = arith.constant 0 : i32
    %c0_i32_0 = arith.constant 0 : i32
    return %arg0, %c0_i32, %arg1 : i32, i32, i32
  }
}

</mosaic_0001>

<llo_original>
// kernel: tpu_custom_call.1
$region0: #{tpu_custom_call.1}
  #allocation0 [shape = 'u32[]', space=smem, size = 0x4, offset = 0x4, fixed_abs, tag = 'smem constant byte address 0x4 - core index']
  #allocation1 [shape = 'u32[144,128]{1,0:T(1,128)}', space=vmem, size = 0x12000, scoped, tag = 'internal scratch']
  %s0 = inlined_call_operand.hbm [shape: f32[2,4,256], index: 0, kind: input, shape index: {}]
  %s1 = inlined_call_operand.vmem [shape: f32[8,4], index: 1, kind: input, shape index: {}]
  %s2 = inlined_call_operand.hbm [shape: f32[2,8,256], index: 2, kind: output, shape index: {}]
  %s3 = sld [smem:[#allocation0]]
  $region22: #{tpu_custom_call.1} parent=0
    _
  %s5 = ssub.s32 1, %s3
  %s6 = scalar_select 0, %s5, %s3
  $region1: #{tpu_custom_call.1} parent=0
    #allocation2 [shape = 'u8[8192]{0}', space=vmem, size = 0x2000, scoped, tag = 'input window, operand 0, single buffered']
    #allocation3 [shape = 's32[1]{0}', space=sflag, size = 0x4, scoped, tag = 'scoped memory for tpu_custom_call.1']
    #allocation4 [shape = 's32[1]{0}', space=sflag, size = 0x4, scoped, tag = 'scoped memory for tpu_custom_call.1']
    #allocation5 [shape = 'u8[16384]{0}', space=vmem, size = 0x4000, scoped, tag = 'output window, operand 0, single buffered']
    %7 = vsyncpa [#allocation3], 0
    %8 = vsyncpa [#allocation4], 0
    // Predicated region
    $region2: #{tpu_custom_call.1} parent=1 // pred_check
      _
    $region3: #{tpu_custom_call.1} parent=1 // pred_check_branch
      %10 = sbr.rel (0) target = $region5
    $region4: #{tpu_custom_call.1} parent=1 // pred_region
      %s12 = ssub.s32 256, 256
      %13 = vsyncadd [#allocation3], %s12
      %s14 = sshll.u32 [#allocation2], 4
      %s15 = int_to_ptr.vmem [resolvable:$true] %s14
      %20 = dma.hbm_to_vmem [thread:$0]  %s0, 256, %s15, [#allocation3], 128, 128, 8
    $region5: #{tpu_custom_call.1} parent=1 // pred_fallthru
      _
    // Predicated region
    $region6: #{tpu_custom_call.1} parent=1 // pred_check
      _
    $region7: #{tpu_custom_call.1} parent=1 // pred_check_branch
      %22 = sbr.rel (0) target = $region9
    $region8: #{tpu_custom_call.1} parent=1 // pred_region
      _
    $region9: #{tpu_custom_call.1} parent=1 // pred_fallthru
      _
    // Predicated region
    $region10: #{tpu_custom_call.1} parent=1 // pred_check
      _
    $region11: #{tpu_custom_call.1} parent=1 // pred_check_branch
      %24 = sbr.rel (0) target = $region13
    $region12: #{tpu_custom_call.1} parent=1 // pred_region
      %25 = dma.done [#allocation3], 256
    $region13: #{tpu_custom_call.1} parent=1 // pred_fallthru
      _
    %v26 = vld [vmem:[%s1] sm:$0xff]
    %v27 = vld [vmem:[#allocation2] sm:$0xff]
    %v29 = vcombine.high %v27, %v27
    %vm30 = vcmask 31744
    %v32 = vsel %vm30, %v26, 0
    %vm34 = vcmask 1043456
    %v35 = vsel %vm34, %v27, 0
    %v37 = vsel %vm34, %v29, 0
    %39 = vmatprep.subr.mxu0 %v37
    %40 = vmatpush1.msra.mxu0 %v35
    %41 = vmatprep.subr.mxu0 0.0
    %42 = vmatpush1.msra.mxu0 0.0
    %43 = vmatprep.subr.mxu0 0.0
    %44 = vmatpush1.msra.mxu0 0.0
    %45 = vmatprep.subr.mxu0 0.0
    %46 = vmatpush1.msra.mxu0 0.0
    %47 = vmatprep.subr.mxu0 0.0
    %48 = vmatpush1.msra.mxu0 0.0
    %49 = vmatprep.subr.mxu0 0.0
    %50 = vmatpush1.msra.mxu0 0.0
    %51 = vmatprep.subr.mxu0 0.0
    %52 = vmatpush1.msra.mxu0 0.0
    %53 = vmatprep.subr.mxu0 0.0
    %54 = vmatpush1.msra.mxu0 0.0
    %55 = vmatprep.subr.mxu0 0.0
    %56 = vmatpush1.msra.mxu0 0.0
    %57 = vmatprep.subr.mxu0 0.0
    %58 = vmatpush1.msra.mxu0 0.0
    %59 = vmatprep.subr.mxu0 0.0
    %60 = vmatpush1.msra.mxu0 0.0
    %61 = vmatprep.subr.mxu0 0.0
    %62 = vmatpush1.msra.mxu0 0.0
    %63 = vmatprep.subr.mxu0 0.0
    %64 = vmatpush1.msra.mxu0 0.0
    %65 = vmatprep.subr.mxu0 0.0
    %66 = vmatpush1.msra.mxu0 0.0
    %67 = vmatprep.subr.mxu0 0.0
    %68 = vmatpush1.msra.mxu0 0.0
    %69 = vmatprep.subr.mxu0 0.0
    %70 = vmatpush1.msra.mxu0 0.0
    %71 = vmatprep.subr.mxu0 0.0
    %72 = vmatpush1.msra.mxu0 0.0
    %73 = vmatprep.subr.mxu0 0.0
    %74 = vmatpush1.msra.mxu0 0.0
    %75 = vmatprep.subr.mxu0 0.0
    %76 = vmatpush1.msra.mxu0 0.0
    %77 = vmatprep.subr.mxu0 0.0
    %78 = vmatpush1.msra.mxu0 0.0
    %79 = vmatprep.subr.mxu0 0.0
    %80 = vmatpush1.msra.mxu0 0.0
    %81 = vmatprep.subr.mxu0 0.0
    %82 = vmatpush1.msra.mxu0 0.0
    %83 = vmatprep.subr.mxu0 0.0
    %84 = vmatpush1.msra.mxu0 0.0
    %85 = vmatprep.subr.mxu0 0.0
    %86 = vmatpush1.msra.mxu0 0.0
    %87 = vmatprep.subr.mxu0 0.0
    %88 = vmatpush1.msra.mxu0 0.0
    %89 = vmatprep.subr.mxu0 0.0
    %90 = vmatpush1.msra.mxu0 0.0
    %91 = vmatprep.subr.mxu0 0.0
    %92 = vmatpush1.msra.mxu0 0.0
    %93 = vmatprep.subr.mxu0 0.0
    %94 = vmatpush1.msra.mxu0 0.0
    %95 = vmatprep.subr.mxu0 0.0
    %96 = vmatpush1.msra.mxu0 0.0
    %97 = vmatprep.subr.mxu0 0.0
    %98 = vmatpush1.msra.mxu0 0.0
    %99 = vmatprep.subr.mxu0 0.0
    %100 = vmatpush1.msra.mxu0 0.0
    %101 = vmatprep.subr.mxu0 0.0
    %102 = vmatpush1.msra.mxu0 0.0
    %103 = vmatprep.mubr.f32.mxu0 0.0
    %104 = vmatmul.mubr.f32.gmra.mrb[0].mxu0 %v32
    %v105 = vpop.f32.mrb[0].mxu0
    %v106 = vadd.f32 0.0, %v105
    %v107 = vpop.f32.mrb[0].mxu0
    %v108 = vadd.f32 0.0, %v107
    %109 = vdwg.mxu0
    %v110 = vmax.f32 %v106, 0.0
    %v111 = vmax.f32 %v108, 0.0
    %112 = vst [vmem:[#allocation5] sm:$0xff] %v110
    %113 = vst [vmem:[#allocation5 + $0x8] sm:$0xff] %v111
    %s114 = scalar_lea.vmem [#allocation2], 8
    %v115 = vld [vmem:[%s114] sm:$0xff]
    %v117 = vcombine.high %v115, %v115
    %v118 = vsel %vm34, %v115, 0
    %v120 = vsel %vm34, %v117, 0
    %122 = vmatprep.subr.mxu0 %v120
    %123 = vmatpush1.msra.mxu0 %v118
    %124 = vmatprep.subr.mxu0 0.0
    %125 = vmatpush1.msra.mxu0 0.0
    %126 = vmatprep.subr.mxu0 0.0
    %127 = vmatpush1.msra.mxu0 0.0
    %128 = vmatprep.subr.mxu0 0.0
    %129 = vmatpush1.msra.mxu0 0.0
    %130 = vmatprep.subr.mxu0 0.0
    %131 = vmatpush1.msra.mxu0 0.0
    %132 = vmatprep.subr.mxu0 0.0
    %133 = vmatpush1.msra.mxu0 0.0
    %134 = vmatprep.subr.mxu0 0.0
    %135 = vmatpush1.msra.mxu0 0.0
    %136 = vmatprep.subr.mxu0 0.0
    %137 = vmatpush1.msra.mxu0 0.0
    %138 = vmatprep.subr.mxu0 0.0
    %139 = vmatpush1.msra.mxu0 0.0
    %140 = vmatprep.subr.mxu0 0.0
    %141 = vmatpush1.msra.mxu0 0.0
    %142 = vmatprep.subr.mxu0 0.0
    %143 = vmatpush1.msra.mxu0 0.0
    %144 = vmatprep.subr.mxu0 0.0
    %145 = vmatpush1.msra.mxu0 0.0
    %146 = vmatprep.subr.mxu0 0.0
    %147 = vmatpush1.msra.mxu0 0.0
    %148 = vmatprep.subr.mxu0 0.0
    %149 = vmatpush1.msra.mxu0 0.0
    %150 = vmatprep.subr.mxu0 0.0
    %151 = vmatpush1.msra.mxu0 0.0
    %152 = vmatprep.subr.mxu0 0.0
    %153 = vmatpush1.msra.mxu0 0.0
    %154 = vmatprep.subr.mxu0 0.0
    %155 = vmatpush1.msra.mxu0 0.0
    %156 = vmatprep.subr.mxu0 0.0
    %157 = vmatpush1.msra.mxu0 0.0
    %158 = vmatprep.subr.mxu0 0.0
    %159 = vmatpush1.msra.mxu0 0.0
    %160 = vmatprep.subr.mxu0 0.0
    %161 = vmatpush1.msra.mxu0 0.0
    %162 = vmatprep.subr.mxu0 0.0
    %163 = vmatpush1.msra.mxu0 0.0
    %164 = vmatprep.subr.mxu0 0.0
    %165 = vmatpush1.msra.mxu0 0.0
    %166 = vmatprep.subr.mxu0 0.0
    %167 = vmatpush1.msra.mxu0 0.0
    %168 = vmatprep.subr.mxu0 0.0
    %169 = vmatpush1.msra.mxu0 0.0
    %170 = vmatprep.subr.mxu0 0.0
    %171 = vmatpush1.msra.mxu0 0.0
    %172 = vmatprep.subr.mxu0 0.0
    %173 = vmatpush1.msra.mxu0 0.0
    %174 = vmatprep.subr.mxu0 0.0
    %175 = vmatpush1.msra.mxu0 0.0
    %176 = vmatprep.subr.mxu0 0.0
    %177 = vmatpush1.msra.mxu0 0.0
    %178 = vmatprep.subr.mxu0 0.0
    %179 = vmatpush1.msra.mxu0 0.0
    %180 = vmatprep.subr.mxu0 0.0
    %181 = vmatpush1.msra.mxu0 0.0
    %182 = vmatprep.subr.mxu0 0.0
    %183 = vmatpush1.msra.mxu0 0.0
    %184 = vmatprep.subr.mxu0 0.0
    %185 = vmatpush1.msra.mxu0 0.0
    %186 = vmatprep.mubr.f32.mxu0 0.0
    %187 = vmatmul.mubr.f32.gmra.mrb[0].mxu0 %v32
    %v188 = vpop.f32.mrb[0].mxu0
    %v189 = vadd.f32 0.0, %v188
    %v190 = vpop.f32.mrb[0].mxu0
    %v191 = vadd.f32 0.0, %v190
    %192 = vdwg.mxu0
    %v193 = vmax.f32 %v189, 0.0
    %v194 = vmax.f32 %v191, 0.0
    %s195 = scalar_lea.vmem [#allocation5], 16
    %196 = vst [vmem:[%s195] sm:$0xff] %v193
    %197 = vst [vmem:[%s195 + $0x8] sm:$0xff] %v194
    // Predicated region
    $region14: #{tpu_custom_call.1} parent=1 // pred_check
      _
    $region15: #{tpu_custom_call.1} parent=1 // pred_check_branch
      %199 = sbr.rel (0) target = $region17
    $region16: #{tpu_custom_call.1} parent=1 // pred_region
      %s201 = ssub.s32 512, 512
      %202 = vsyncadd [#allocation4], %s201
      %s203 = sshll.u32 [#allocation5], 4
      %s204 = int_to_ptr.vmem [resolvable:$true] %s203
      %209 = dma.vmem_to_hbm [thread:$0]  %s204, 512, %s2, [#allocation4], 256, 256, 16
    $region17: #{tpu_custom_call.1} parent=1 // pred_fallthru
      _
    // Predicated region
    $region18: #{tpu_custom_call.1} parent=1 // pred_check
      _
    $region19: #{tpu_custom_call.1} parent=1 // pred_check_branch
      %211 = sbr.rel (0) target = $region21
    $region20: #{tpu_custom_call.1} parent=1 // pred_region
      %212 = dma.done [#allocation4], 512
    $region21: #{tpu_custom_call.1} parent=1 // pred_fallthru
      _
    %213 = vsyncpa [#allocation3], 1
    %214 = vsyncpa [#allocation4], 1

</llo_original>
